<compile_context>
chip_gen: v7x
topology: tpu7x:2x2x1
jax: 0.10.0
libtpu: 0.0.40
codegen_flags: <defaults>
</compile_context>

<pallas_src>
import functools

import jax
import jax.numpy as jnp
from jax.experimental import pallas as pl
from jax.experimental.pallas import tpu as pltpu


def _cdiv(a: int, b: int) -> int:
    return -(-a // b)


def _round_up(x: int, m: int) -> int:
    return _cdiv(x, m) * m


def _pick_batch_tiling(batch: int, batch_tile: int):
    """Choose a sublane-aligned batch tile that balances tiles and keeps the
    grid >= 2 steps for large-enough batches (v7x megacore)."""
    b8 = _round_up(batch, 8)
    n_tiles = _cdiv(b8, batch_tile)
    if b8 >= 16:
        n_tiles = max(n_tiles, 2)          # keep both v7x TensorCores busy
    tb = _round_up(_cdiv(b8, n_tiles), 8)  # balanced, sublane-aligned tile
    n_tiles = _cdiv(b8, tb)
    return tb, tb * n_tiles, n_tiles


def _multihead_kernel(x_ref, w_ref, b_ref, out_ref, *, s, p_h, p_s, p_o,
                      action_dim):
    """One batch tile: trunk (2x Linear+ReLU) + fused value/policy head + softmax.

    x_ref   : (tb, S)              unpadded state tile
    w_ref   : (S + P_h + P_s, N)   packed weight slab (see module docstring)
    b_ref   : (3, 1, N)            packed padded biases [b1, b2, b_heads]
    out_ref : (tb, P_o)            cols [0,A) = policy probs, col A = value,
                                   cols > A = 0
    """
    x = x_ref[...]  # (tb, S), f32

    # Static, tile-aligned slices of the resident weight slab.
    w1 = w_ref[0:s, 0:p_h]                        # (S,   P_h) true K = S
    w2 = w_ref[s:s + p_h, 0:p_s]                  # (P_h, P_s) K pad rows = 0
    wh = w_ref[s + p_h:s + p_h + p_s, 0:p_o]      # (P_s, P_o) K pad rows = 0

    # Trunk: Linear(S -> 2S) + ReLU.  K is the true S (no input padding).
    h1 = jnp.dot(x, w1, preferred_element_type=jnp.float32) + b_ref[0][:, :p_h]
    h1 = jnp.maximum(h1, 0.0)

    # Trunk: Linear(2S -> S) + ReLU.  K kept lane-padded (h1 pad cols are zero
    # and w2 pad rows are zero -> mathematically inert, no lane slice of h1).
    h2 = jnp.dot(h1, w2, preferred_element_type=jnp.float32) + b_ref[1][:, :p_s]
    h2 = jnp.maximum(h2, 0.0)

    # Fused heads: one lane-dense matmul producing [policy logits | value | 0].
    head = jnp.dot(h2, wh, preferred_element_type=jnp.float32) + b_ref[2][:, :p_o]

    # Numerically-stable softmax over the policy columns only (static mask).
    col = jax.lax.broadcasted_iota(jnp.int32, head.shape, 1)
    is_policy = col < action_dim
    logits = jnp.where(is_policy, head, jnp.float32(-1e30))
    m = jnp.max(logits, axis=-1, keepdims=True)
    e = jnp.where(is_policy, jnp.exp(logits - m), 0.0)
    denom = jnp.sum(e, axis=-1, keepdims=True)
    probs = e * pl.reciprocal(denom, approx=False)  # exact: 1e-5 tolerance

    # Single lane-dense store: probs in policy cols, raw head elsewhere
    # (col A = value, padded cols are exactly 0).
    out_ref[...] = jnp.where(is_policy, probs, head).astype(out_ref.dtype)


@functools.partial(jax.jit, static_argnames=("action_dim", "batch_tile"))
def multihead_forward(state, w_packed, b_packed, *, action_dim, batch_tile=256):
    """state: (B, S). w_packed: (S+P_h+P_s, N). b_packed: (3, 1, N).

    Returns (value (B,1), policy (B,A)) matching MultiHeadNetwork.forward."""
    B, S = state.shape
    H = 2 * S
    p_h = _round_up(H, 128)
    p_s = _round_up(S, 128)
    p_o = _round_up(action_dim + 1, 128)
    n_lane = max(p_h, p_s, p_o)
    assert w_packed.shape == (S + p_h + p_s, n_lane)
    assert b_packed.shape == (3, 1, n_lane)

    tb, B_p, n_tiles = _pick_batch_tiling(B, batch_tile)

    # Pad only the batch dim (feature dim stays at the true S).
    x = state.astype(jnp.float32)
    if B_p != B:
        x = jnp.pad(x, ((0, B_p - B), (0, 0)))

    out = pl.pallas_call(
        functools.partial(_multihead_kernel, s=S, p_h=p_h, p_s=p_s, p_o=p_o,
                          action_dim=action_dim),
        out_shape=jax.ShapeDtypeStruct((B_p, p_o), jnp.float32),
        grid_spec=pltpu.PrefetchScalarGridSpec(
            num_scalar_prefetch=0,
            grid=(n_tiles,),
            in_specs=[
                pl.BlockSpec((tb, S), lambda i: (i, 0)),              # state tile
                pl.BlockSpec((S + p_h + p_s, n_lane),
                             lambda i: (0, 0)),                        # weights (resident)
                pl.BlockSpec((3, 1, n_lane), lambda i: (0, 0, 0)),     # biases  (resident)
            ],
            out_specs=pl.BlockSpec((tb, p_o), lambda i: (i, 0)),       # fused output slab
        ),
        compiler_params=pltpu.CompilerParams(
            dimension_semantics=("parallel",),                         # megacore on v7x
        ),
    )(x, w_packed, b_packed)

    policy = out[:B, :action_dim].astype(state.dtype)
    value = out[:B, action_dim:action_dim + 1].astype(state.dtype)
    return value, policy


def init_params(key, state_space_size, action_space_size, dtype=jnp.float32):
    """Deterministic init mimicking torch.nn.Linear (uniform +-1/sqrt(fan_in)).

    Weights are stored (in_features, out_features)."""
    S, A = state_space_size, action_space_size

    def linear(k, fan_in, fan_out):
        kw, kb = jax.random.split(k)
        bound = 1.0 / jnp.sqrt(jnp.asarray(fan_in, dtype=jnp.float32))
        w = jax.random.uniform(kw, (fan_in, fan_out), dtype=dtype,
                               minval=-bound, maxval=bound)
        b = jax.random.uniform(kb, (1, fan_out), dtype=dtype,
                               minval=-bound, maxval=bound)
        return w, b

    k1, k2, k3, k4 = jax.random.split(key, 4)
    w1, b1 = linear(k1, S, 2 * S)        # lin_layer_1
    w2, b2 = linear(k2, 2 * S, S)        # lin_layer_2
    wv, bv = linear(k3, S, 1)            # value head
    wp, bp = linear(k4, S, A)            # policy head
    return dict(w1=w1, b1=b1, w2=w2, b2=b2, wv=wv, bv=bv, wp=wp, bp=bp)


def pack_params(params, state_space_size, action_space_size):
    """Pack all weights into one K-stacked, lane-padded slab and biases into a
    (3, 1, N) buffer.

    Slab rows: [0,S)=w1 (true K), [S,S+P_h)=w2 (K padded), [S+P_h,S+P_h+P_s)=
    fused heads (K padded; cols [0,A)=policy, col A=value, rest zero)."""
    S, A = state_space_size, action_space_size
    H = 2 * S
    p_h = _round_up(H, 128)
    p_s = _round_up(S, 128)
    p_o = _round_up(A + 1, 128)
    n_lane = max(p_h, p_s, p_o)

    w = jnp.zeros((S + p_h + p_s, n_lane), jnp.float32)
    w = w.at[:S, :H].set(params["w1"].astype(jnp.float32))
    w = w.at[S:S + H, :S].set(params["w2"].astype(jnp.float32))
    r = S + p_h
    w = w.at[r:r + S, :A].set(params["wp"].astype(jnp.float32))
    w = w.at[r:r + S, A:A + 1].set(params["wv"].astype(jnp.float32))

    b = jnp.zeros((3, 1, n_lane), jnp.float32)
    b = b.at[0, :, :H].set(params["b1"].astype(jnp.float32))
    b = b.at[1, :, :S].set(params["b2"].astype(jnp.float32))
    b = b.at[2, :, :A].set(params["bp"].astype(jnp.float32))
    b = b.at[2, :, A:A + 1].set(params["bv"].astype(jnp.float32))
    return w, b


def _reference_forward(state, p):
    h1 = jnp.maximum(state @ p["w1"] + p["b1"], 0.0)
    h2 = jnp.maximum(h1 @ p["w2"] + p["b2"], 0.0)
    value = h2 @ p["wv"] + p["bv"]
    logits = h2 @ p["wp"] + p["bp"]
    policy = jax.nn.softmax(logits, axis=-1)
    return value, policy


if __name__ == "__main__":
    key = jax.random.PRNGKey(0)
    k_params, k_state = jax.random.split(key)

    B = 8            # batch of states
    S = 32           # state_space_size
    A = 16           # action_space_size

    params = init_params(k_params, S, A, dtype=jnp.float32)
    w_packed, b_packed = pack_params(params, S, A)
    state = jax.random.normal(k_state, (B, S), dtype=jnp.float32)

    value, policy = multihead_forward(state, w_packed, b_packed, action_dim=A)
    jax.block_until_ready((value, policy))

    # sanity check against pure-JAX reference
    ref_value, ref_policy = _reference_forward(state, params)
    assert value.shape == (B, 1) and policy.shape == (B, A)
    assert jnp.allclose(value, ref_value, atol=1e-5, rtol=1e-5)
    assert jnp.allclose(policy, ref_policy, atol=1e-5, rtol=1e-5)
    assert jnp.allclose(jnp.sum(policy, axis=-1), 1.0, atol=1e-5)

    print("KERNEL_OK")
</pallas_src>

<mosaic_0001>
module attributes {stable_mosaic.version = 11 : i64} {
  func.func @_multihead_kernel(%arg0: i32, %arg1: memref<8x32xf32, #tpu.memory_space<vmem>>, %arg2: memref<288x128xf32, #tpu.memory_space<vmem>>, %arg3: memref<3x1x128xf32, #tpu.memory_space<vmem>>, %arg4: memref<8x128xf32, #tpu.memory_space<vmem>>) attributes {dimension_semantics = [#tpu.dimension_semantics<parallel>], iteration_bounds = array<i64: 1>, scalar_prefetch = 0 : i64, scratch_operands = 0 : i64, tpu.core_type = #tpu.core_type<tc>, window_params = [{transform_indices = @transform_0, window_bounds = array<i64: 8, 32>}, {pipeline_mode = #tpu.pipeline_mode<synchronous>, transform_indices = @transform_1, window_bounds = array<i64: 288, 128>}, {pipeline_mode = #tpu.pipeline_mode<synchronous>, transform_indices = @transform_2, window_bounds = array<i64: 3, 1, 128>}, {transform_indices = @transform_3, window_bounds = array<i64: 8, 128>}]} {
    %c0 = arith.constant 0 : index
    %c0_0 = arith.constant 0 : index
    %0 = vector.load %arg1[%c0, %c0_0] : memref<8x32xf32, #tpu.memory_space<vmem>>, vector<8x32xf32>
    %c0_1 = arith.constant 0 : index
    %c0_2 = arith.constant 0 : index
    %1 = vector.load %arg2[%c0_1, %c0_2] : memref<288x128xf32, #tpu.memory_space<vmem>>, vector<32x128xf32>
    %c32 = arith.constant 32 : index
    %c0_3 = arith.constant 0 : index
    %2 = vector.load %arg2[%c32, %c0_3] : memref<288x128xf32, #tpu.memory_space<vmem>>, vector<128x128xf32>
    %c160 = arith.constant 160 : index
    %c0_4 = arith.constant 0 : index
    %3 = vector.load %arg2[%c160, %c0_4] : memref<288x128xf32, #tpu.memory_space<vmem>>, vector<128x128xf32>
    %cst = arith.constant dense<0.000000e+00> : vector<8x128xf32>
    %4 = tpu.matmul %0, %1, %cst {dimension_numbers = #tpu.dot_dimension_numbers<[1], [0], [0], [1], [0, 0, 1, 1], [], []>} : vector<8x32xf32>, vector<32x128xf32>, vector<8x128xf32> -> vector<8x128xf32>
    %c0_5 = arith.constant 0 : index
    %c0_6 = arith.constant 0 : index
    %c0_7 = arith.constant 0 : index
    %5 = vector.load %arg3[%c0_5, %c0_6, %c0_7] : memref<3x1x128xf32, #tpu.memory_space<vmem>>, vector<1x1x128xf32>
    %6 = vector.shape_cast %5 : vector<1x1x128xf32> to vector<1x128xf32>
    %7 = vector.broadcast %6 : vector<1x128xf32> to vector<8x128xf32>
    %8 = arith.addf %4, %7 : vector<8x128xf32>
    %cst_8 = arith.constant 0.000000e+00 : f32
    %9 = vector.broadcast %cst_8 : f32 to vector<8x128xf32>
    %10 = arith.maximumf %8, %9 : vector<8x128xf32>
    %cst_9 = arith.constant dense<0.000000e+00> : vector<8x128xf32>
    %11 = tpu.matmul %10, %2, %cst_9 {dimension_numbers = #tpu.dot_dimension_numbers<[1], [0], [0], [1], [0, 0, 1, 1], [], []>} : vector<8x128xf32>, vector<128x128xf32>, vector<8x128xf32> -> vector<8x128xf32>
    %c1 = arith.constant 1 : index
    %c0_10 = arith.constant 0 : index
    %c0_11 = arith.constant 0 : index
    %12 = vector.load %arg3[%c1, %c0_10, %c0_11] : memref<3x1x128xf32, #tpu.memory_space<vmem>>, vector<1x1x128xf32>
    %13 = vector.shape_cast %12 : vector<1x1x128xf32> to vector<1x128xf32>
    %14 = vector.broadcast %13 : vector<1x128xf32> to vector<8x128xf32>
    %15 = arith.addf %11, %14 : vector<8x128xf32>
    %cst_12 = arith.constant 0.000000e+00 : f32
    %16 = vector.broadcast %cst_12 : f32 to vector<8x128xf32>
    %17 = arith.maximumf %15, %16 : vector<8x128xf32>
    %cst_13 = arith.constant dense<0.000000e+00> : vector<8x128xf32>
    %18 = tpu.matmul %17, %3, %cst_13 {dimension_numbers = #tpu.dot_dimension_numbers<[1], [0], [0], [1], [0, 0, 1, 1], [], []>} : vector<8x128xf32>, vector<128x128xf32>, vector<8x128xf32> -> vector<8x128xf32>
    %c2 = arith.constant 2 : index
    %c0_14 = arith.constant 0 : index
    %c0_15 = arith.constant 0 : index
    %19 = vector.load %arg3[%c2, %c0_14, %c0_15] : memref<3x1x128xf32, #tpu.memory_space<vmem>>, vector<1x1x128xf32>
    %20 = vector.shape_cast %19 : vector<1x1x128xf32> to vector<1x128xf32>
    %21 = vector.broadcast %20 : vector<1x128xf32> to vector<8x128xf32>
    %22 = arith.addf %18, %21 : vector<8x128xf32>
    %23 = tpu.iota {dimensions = array<i32: 1>} : vector<8x128xi32>
    %c16_i32 = arith.constant 16 : i32
    %24 = vector.broadcast %c16_i32 : i32 to vector<8x128xi32>
    %25 = arith.cmpi slt, %23, %24 : vector<8x128xi32>
    %cst_16 = arith.constant -1.000000e+30 : f32
    %26 = vector.broadcast %cst_16 : f32 to vector<8x128xf32>
    %27 = arith.select %25, %22, %26 : vector<8x128xi1>, vector<8x128xf32>
    %cst_17 = arith.constant dense<0xFF800000> : vector<8xf32>
    %28 = vector.multi_reduction <maximumf>, %27, %cst_17 [1] : vector<8x128xf32> to vector<8xf32>
    %29 = vector.shape_cast %28 : vector<8xf32> to vector<8x1xf32>
    %30 = vector.broadcast %29 : vector<8x1xf32> to vector<8x128xf32>
    %31 = arith.subf %27, %30 : vector<8x128xf32>
    %32 = math.exp %31 : vector<8x128xf32>
    %cst_18 = arith.constant 0.000000e+00 : f32
    %33 = vector.broadcast %cst_18 : f32 to vector<8x128xf32>
    %34 = arith.select %25, %32, %33 : vector<8x128xi1>, vector<8x128xf32>
    %cst_19 = arith.constant dense<0.000000e+00> : vector<8xf32>
    %35 = vector.multi_reduction <add>, %34, %cst_19 [1] : vector<8x128xf32> to vector<8xf32>
    %36 = vector.shape_cast %35 : vector<8xf32> to vector<8x1xf32>
    %37 = tpu.reciprocal %36 : vector<8x1xf32> -> vector<8x1xf32>
    %38 = vector.broadcast %37 : vector<8x1xf32> to vector<8x128xf32>
    %39 = arith.mulf %34, %38 : vector<8x128xf32>
    %40 = arith.select %25, %39, %22 : vector<8x128xi1>, vector<8x128xf32>
    %c0_20 = arith.constant 0 : index
    %c0_21 = arith.constant 0 : index
    %41 = vector.load %arg4[%c0_20, %c0_21] : memref<8x128xf32, #tpu.memory_space<vmem>>, vector<8x128xf32>
    tpu.vector_store %arg4[%c0_20, %c0_21], %40 {strides = array<i32>} : memref<8x128xf32, #tpu.memory_space<vmem>>, vector<8x128xf32>,
    return
  }
  func.func @transform_0(%arg0: i32) -> (i32, i32) {
    %c0_i32 = arith.constant 0 : i32
    %c0_i32_0 = arith.constant 0 : i32
    return %arg0, %c0_i32 : i32, i32
  }
  func.func @transform_1(%arg0: i32) -> (i32, i32) {
    %c0_i32 = arith.constant 0 : i32
    %c0_i32_0 = arith.constant 0 : i32
    %c0_i32_1 = arith.constant 0 : i32
    return %c0_i32, %c0_i32_0 : i32, i32
  }
  func.func @transform_2(%arg0: i32) -> (i32, i32, i32) {
    %c0_i32 = arith.constant 0 : i32
    %c0_i32_0 = arith.constant 0 : i32
    %c0_i32_1 = arith.constant 0 : i32
    %c0_i32_2 = arith.constant 0 : i32
    return %c0_i32, %c0_i32_0, %c0_i32_1 : i32, i32, i32
  }
  func.func @transform_3(%arg0: i32) -> (i32, i32) {
    %c0_i32 = arith.constant 0 : i32
    %c0_i32_0 = arith.constant 0 : i32
    return %arg0, %c0_i32 : i32, i32
  }
}

</mosaic_0001>

<llo_original>
// kernel: multihead_forward.1
$region0: #{multihead_forward.1}
  #allocation0 [shape = 'u32[]', space=smem, size = 0x4, offset = 0x4, fixed_abs, tag = 'smem constant byte address 0x4 - core index']
  #allocation1 [shape = 'u32[144,128]{1,0:T(1,128)}', space=vmem, size = 0x12000, scoped, tag = 'internal scratch']
  %s0 = inlined_call_operand.hbm [shape: f32[8,32], index: 0, kind: input, shape index: {}]
  %s1 = inlined_call_operand.hbm [shape: f32[288,128], index: 1, kind: input, shape index: {}]
  %s2 = inlined_call_operand.vmem [shape: f32[3,1,128], index: 2, kind: input, shape index: {}]
  %s3 = inlined_call_operand.vmem [shape: f32[8,128], index: 3, kind: output, shape index: {}]
  %s4 = sld [smem:[#allocation0]]
  $region30: #{multihead_forward.1} parent=0
    _
  %s6 = ssub.s32 1, %s4
  %s7 = scalar_select 0, %s6, %s4
  $region1: #{multihead_forward.1} parent=0
    #allocation2 [shape = 'u8[4096]{0}', space=vmem, size = 0x1000, scoped, tag = 'input window, operand 0, single buffered']
    #allocation3 [shape = 's32[1]{0}', space=sflag, size = 0x4, scoped, tag = 'scoped memory for multihead_forward.1']
    #allocation4 [shape = 'u8[147456]{0}', space=vmem, size = 0x24000, scoped, tag = 'input window, operand 1, single buffered']
    #allocation5 [shape = 's32[1]{0}', space=sflag, size = 0x4, scoped, tag = 'scoped memory for multihead_forward.1']
    %8 = vsyncpa [#allocation3], 0
    %9 = vsyncpa [#allocation5], 0
    // Predicated region
    $region2: #{multihead_forward.1} parent=1 // pred_check
      _
    $region3: #{multihead_forward.1} parent=1 // pred_check_branch
      %11 = sbr.rel (0) target = $region5
    $region4: #{multihead_forward.1} parent=1 // pred_region
      %s13 = ssub.s32 128, 128
      %14 = vsyncadd [#allocation3], %s13
      %s16 = sshll.u32 [#allocation2], 4
      %s17 = int_to_ptr.vmem [resolvable:$true] %s16
      %19 = dma.hbm_to_vmem [thread:$0]  %s0, 128, %s17, [#allocation3]
    $region5: #{multihead_forward.1} parent=1 // pred_fallthru
      _
    // Predicated region
    $region6: #{multihead_forward.1} parent=1 // pred_check
      _
    $region7: #{multihead_forward.1} parent=1 // pred_check_branch
      %21 = sbr.rel (0) target = $region9
    $region8: #{multihead_forward.1} parent=1 // pred_region
      %s23 = ssub.s32 4608, 4608
      %24 = vsyncadd [#allocation5], %s23
      %s25 = sshll.u32 [#allocation4], 4
      %s26 = int_to_ptr.vmem [resolvable:$true] %s25
      %31 = dma.hbm_to_vmem [thread:$0]  %s1, 4608, %s26, [#allocation5], 128, 128, 8
    $region9: #{multihead_forward.1} parent=1 // pred_fallthru
      _
    // Predicated region
    $region10: #{multihead_forward.1} parent=1 // pred_check
      _
    $region11: #{multihead_forward.1} parent=1 // pred_check_branch
      %33 = sbr.rel (0) target = $region13
    $region12: #{multihead_forward.1} parent=1 // pred_region
      _
    $region13: #{multihead_forward.1} parent=1 // pred_fallthru
      _
    // Predicated region
    $region14: #{multihead_forward.1} parent=1 // pred_check
      _
    $region15: #{multihead_forward.1} parent=1 // pred_check_branch
      %35 = sbr.rel (0) target = $region17
    $region16: #{multihead_forward.1} parent=1 // pred_region
      %36 = dma.done [#allocation3], 128
    $region17: #{multihead_forward.1} parent=1 // pred_fallthru
      _
    // Predicated region
    $region18: #{multihead_forward.1} parent=1 // pred_check
      _
    $region19: #{multihead_forward.1} parent=1 // pred_check_branch
      %38 = sbr.rel (0) target = $region21
    $region20: #{multihead_forward.1} parent=1 // pred_region
      %39 = dma.done [#allocation5], 4608
    $region21: #{multihead_forward.1} parent=1 // pred_fallthru
      _
    %v40 = vld [vmem:[#allocation2] sm:$0xff]
    %v41 = vld [vmem:[#allocation4] sm:$0xff]
    %v42 = vld [vmem:[#allocation4 + $0x8] sm:$0xff]
    %v43 = vld [vmem:[#allocation4 + $0x10] sm:$0xff]
    %v44 = vld [vmem:[#allocation4 + $0x18] sm:$0xff]
    %v45 = vld [vmem:[#allocation4 + $0x20] sm:$0xff]
    %v46 = vld [vmem:[#allocation4 + $0x28] sm:$0xff]
    %v47 = vld [vmem:[#allocation4 + $0x30] sm:$0xff]
    %v48 = vld [vmem:[#allocation4 + $0x38] sm:$0xff]
    %v49 = vld [vmem:[#allocation4 + $0x40] sm:$0xff]
    %v50 = vld [vmem:[#allocation4 + $0x48] sm:$0xff]
    %v51 = vld [vmem:[#allocation4 + $0x50] sm:$0xff]
    %v52 = vld [vmem:[#allocation4 + $0x58] sm:$0xff]
    %v53 = vld [vmem:[#allocation4 + $0x60] sm:$0xff]
    %v54 = vld [vmem:[#allocation4 + $0x68] sm:$0xff]
    %v55 = vld [vmem:[#allocation4 + $0x70] sm:$0xff]
    %v56 = vld [vmem:[#allocation4 + $0x78] sm:$0xff]
    %v57 = vld [vmem:[#allocation4 + $0x80] sm:$0xff]
    %v58 = vld [vmem:[#allocation4 + $0x88] sm:$0xff]
    %v59 = vld [vmem:[#allocation4 + $0x90] sm:$0xff]
    %v60 = vld [vmem:[#allocation4 + $0x98] sm:$0xff]
    %v61 = vld [vmem:[#allocation4 + $0xa0] sm:$0xff]
    %v62 = vld [vmem:[#allocation4 + $0xa8] sm:$0xff]
    %v63 = vld [vmem:[#allocation4 + $0xb0] sm:$0xff]
    %v64 = vld [vmem:[#allocation4 + $0xb8] sm:$0xff]
    %v65 = vld [vmem:[#allocation4 + $0xc0] sm:$0xff]
    %v66 = vld [vmem:[#allocation4 + $0xc8] sm:$0xff]
    %v67 = vld [vmem:[#allocation4 + $0xd0] sm:$0xff]
    %v68 = vld [vmem:[#allocation4 + $0xd8] sm:$0xff]
    %v69 = vld [vmem:[#allocation4 + $0xe0] sm:$0xff]
    %v70 = vld [vmem:[#allocation4 + $0xe8] sm:$0xff]
    %v71 = vld [vmem:[#allocation4 + $0xf0] sm:$0xff]
    %v72 = vld [vmem:[#allocation4 + $0xf8] sm:$0xff]
    %v73 = vld [vmem:[#allocation4 + $0x100] sm:$0xff]
    %v74 = vld [vmem:[#allocation4 + $0x108] sm:$0xff]
    %v75 = vld [vmem:[#allocation4 + $0x110] sm:$0xff]
    %v76 = vld [vmem:[#allocation4 + $0x118] sm:$0xff]
    %v77 = vld [vmem:[%s2] sm:$0x1]
    %v79 = vlaneseq
    %v80 = vshrl.u32 %v79, 7
    %v81 = vsub.s32 0, %v80
    %v82 = vrot.slane %v77, %v81
    %vm84 = vcmask 261120
    %v86 = vsel %vm84, %v40, 0
    %88 = vmatprep.subr.mxu0 0.0
    %89 = vmatpush1.msra.mxu0 %v41
    %90 = vmatprep.subr.mxu0 0.0
    %91 = vmatpush1.msra.mxu0 %v42
    %92 = vmatprep.subr.mxu0 0.0
    %93 = vmatpush1.msra.mxu0 %v43
    %94 = vmatprep.subr.mxu0 0.0
    %95 = vmatpush1.msra.mxu0 %v44
    %96 = vmatprep.subr.mxu0 0.0
    %97 = vmatpush1.msra.mxu0 0.0
    %98 = vmatprep.subr.mxu0 0.0
    %99 = vmatpush1.msra.mxu0 0.0
    %100 = vmatprep.subr.mxu0 0.0
    %101 = vmatpush1.msra.mxu0 0.0
    %102 = vmatprep.subr.mxu0 0.0
    %103 = vmatpush1.msra.mxu0 0.0
    %104 = vmatprep.subr.mxu0 0.0
    %105 = vmatpush1.msra.mxu0 0.0
    %106 = vmatprep.subr.mxu0 0.0
    %107 = vmatpush1.msra.mxu0 0.0
    %108 = vmatprep.subr.mxu0 0.0
    %109 = vmatpush1.msra.mxu0 0.0
    %110 = vmatprep.subr.mxu0 0.0
    %111 = vmatpush1.msra.mxu0 0.0
    %112 = vmatprep.subr.mxu0 0.0
    %113 = vmatpush1.msra.mxu0 0.0
    %114 = vmatprep.subr.mxu0 0.0
    %115 = vmatpush1.msra.mxu0 0.0
    %116 = vmatprep.subr.mxu0 0.0
    %117 = vmatpush1.msra.mxu0 0.0
    %118 = vmatprep.subr.mxu0 0.0
    %119 = vmatpush1.msra.mxu0 0.0
    %120 = vmatprep.subr.mxu0 0.0
    %121 = vmatpush1.msra.mxu0 0.0
    %122 = vmatprep.subr.mxu0 0.0
    %123 = vmatpush1.msra.mxu0 0.0
    %124 = vmatprep.subr.mxu0 0.0
    %125 = vmatpush1.msra.mxu0 0.0
    %126 = vmatprep.subr.mxu0 0.0
    %127 = vmatpush1.msra.mxu0 0.0
    %128 = vmatprep.subr.mxu0 0.0
    %129 = vmatpush1.msra.mxu0 0.0
    %130 = vmatprep.subr.mxu0 0.0
    %131 = vmatpush1.msra.mxu0 0.0
    %132 = vmatprep.subr.mxu0 0.0
    %133 = vmatpush1.msra.mxu0 0.0
    %134 = vmatprep.subr.mxu0 0.0
    %135 = vmatpush1.msra.mxu0 0.0
    %136 = vmatprep.subr.mxu0 0.0
    %137 = vmatpush1.msra.mxu0 0.0
    %138 = vmatprep.subr.mxu0 0.0
    %139 = vmatpush1.msra.mxu0 0.0
    %140 = vmatprep.subr.mxu0 0.0
    %141 = vmatpush1.msra.mxu0 0.0
    %142 = vmatprep.subr.mxu0 0.0
    %143 = vmatpush1.msra.mxu0 0.0
    %144 = vmatprep.subr.mxu0 0.0
    %145 = vmatpush1.msra.mxu0 0.0
    %146 = vmatprep.subr.mxu0 0.0
    %147 = vmatpush1.msra.mxu0 0.0
    %148 = vmatprep.subr.mxu0 0.0
    %149 = vmatpush1.msra.mxu0 0.0
    %150 = vmatprep.subr.mxu0 0.0
    %151 = vmatpush1.msra.mxu0 0.0
    %152 = vmatprep.mubr.f32.mxu0 0.0
    %153 = vmatmul.mubr.f32.gmra.mrb[0].mxu0 %v86
    %v154 = vpop.f32.mrb[0].mxu0
    %v155 = vadd.f32 %v82, %v154
    %v156 = vpop.f32.mrb[0].mxu0
    %157 = vdwg.mxu0
    %v158 = vmax.f32 %v155, 0.0
    %s159 = scalar_lea.vmem %s2, 1
    %v160 = vld [vmem:[%s159] sm:$0x1]
    %v162 = vlaneseq
    %v163 = vshrl.u32 %v162, 7
    %v164 = vsub.s32 0, %v163
    %v165 = vrot.slane %v160, %v164
    %167 = vmatprep.subr.mxu0 0.0
    %168 = vmatpush1.msra.mxu0 %v45
    %169 = vmatprep.subr.mxu0 0.0
    %170 = vmatpush1.msra.mxu0 %v46
    %171 = vmatprep.subr.mxu0 0.0
    %172 = vmatpush1.msra.mxu0 %v47
    %173 = vmatprep.subr.mxu0 0.0
    %174 = vmatpush1.msra.mxu0 %v48
    %175 = vmatprep.subr.mxu0 0.0
    %176 = vmatpush1.msra.mxu0 %v49
    %177 = vmatprep.subr.mxu0 0.0
    %178 = vmatpush1.msra.mxu0 %v50
    %179 = vmatprep.subr.mxu0 0.0
    %180 = vmatpush1.msra.mxu0 %v51
    %181 = vmatprep.subr.mxu0 0.0
    %182 = vmatpush1.msra.mxu0 %v52
    %183 = vmatprep.subr.mxu0 0.0
    %184 = vmatpush1.msra.mxu0 %v53
    %185 = vmatprep.subr.mxu0 0.0
    %186 = vmatpush1.msra.mxu0 %v54
    %187 = vmatprep.subr.mxu0 0.0
    %188 = vmatpush1.msra.mxu0 %v55
    %189 = vmatprep.subr.mxu0 0.0
    %190 = vmatpush1.msra.mxu0 %v56
    %191 = vmatprep.subr.mxu0 0.0
    %192 = vmatpush1.msra.mxu0 %v57
    %193 = vmatprep.subr.mxu0 0.0
    %194 = vmatpush1.msra.mxu0 %v58
    %195 = vmatprep.subr.mxu0 0.0
    %196 = vmatpush1.msra.mxu0 %v59
    %197 = vmatprep.subr.mxu0 0.0
    %198 = vmatpush1.msra.mxu0 %v60
    %199 = vmatprep.subr.mxu0 0.0
    %200 = vmatpush1.msra.mxu0 0.0
    %201 = vmatprep.subr.mxu0 0.0
    %202 = vmatpush1.msra.mxu0 0.0
    %203 = vmatprep.subr.mxu0 0.0
    %204 = vmatpush1.msra.mxu0 0.0
    %205 = vmatprep.subr.mxu0 0.0
    %206 = vmatpush1.msra.mxu0 0.0
    %207 = vmatprep.subr.mxu0 0.0
    %208 = vmatpush1.msra.mxu0 0.0
    %209 = vmatprep.subr.mxu0 0.0
    %210 = vmatpush1.msra.mxu0 0.0
    %211 = vmatprep.subr.mxu0 0.0
    %212 = vmatpush1.msra.mxu0 0.0
    %213 = vmatprep.subr.mxu0 0.0
    %214 = vmatpush1.msra.mxu0 0.0
    %215 = vmatprep.subr.mxu0 0.0
    %216 = vmatpush1.msra.mxu0 0.0
    %217 = vmatprep.subr.mxu0 0.0
    %218 = vmatpush1.msra.mxu0 0.0
    %219 = vmatprep.subr.mxu0 0.0
    %220 = vmatpush1.msra.mxu0 0.0
    %221 = vmatprep.subr.mxu0 0.0
    %222 = vmatpush1.msra.mxu0 0.0
    %223 = vmatprep.subr.mxu0 0.0
    %224 = vmatpush1.msra.mxu0 0.0
    %225 = vmatprep.subr.mxu0 0.0
    %226 = vmatpush1.msra.mxu0 0.0
    %227 = vmatprep.subr.mxu0 0.0
    %228 = vmatpush1.msra.mxu0 0.0
    %229 = vmatprep.subr.mxu0 0.0
    %230 = vmatpush1.msra.mxu0 0.0
    %231 = vmatprep.mubr.f32.mxu0 0.0
    %232 = vmatmul.mubr.f32.gmra.mrb[0].mxu0 %v158
    %v233 = vpop.f32.mrb[0].mxu0
    %v234 = vadd.f32 %v165, %v233
    %v235 = vpop.f32.mrb[0].mxu0
    %236 = vdwg.mxu0
    %v237 = vmax.f32 %v234, 0.0
    %s238 = scalar_lea.vmem %s2, 2
    %v239 = vld [vmem:[%s238] sm:$0x1]
    %v241 = vlaneseq
    %v242 = vshrl.u32 %v241, 7
    %v243 = vsub.s32 0, %v242
    %v244 = vrot.slane %v239, %v243
    %246 = vmatprep.subr.mxu0 0.0
    %247 = vmatpush1.msra.mxu0 %v61
    %248 = vmatprep.subr.mxu0 0.0
    %249 = vmatpush1.msra.mxu0 %v62
    %250 = vmatprep.subr.mxu0 0.0
    %251 = vmatpush1.msra.mxu0 %v63
    %252 = vmatprep.subr.mxu0 0.0
    %253 = vmatpush1.msra.mxu0 %v64
    %254 = vmatprep.subr.mxu0 0.0
    %255 = vmatpush1.msra.mxu0 %v65
    %256 = vmatprep.subr.mxu0 0.0
    %257 = vmatpush1.msra.mxu0 %v66
    %258 = vmatprep.subr.mxu0 0.0
    %259 = vmatpush1.msra.mxu0 %v67
    %260 = vmatprep.subr.mxu0 0.0
    %261 = vmatpush1.msra.mxu0 %v68
    %262 = vmatprep.subr.mxu0 0.0
    %263 = vmatpush1.msra.mxu0 %v69
    %264 = vmatprep.subr.mxu0 0.0
    %265 = vmatpush1.msra.mxu0 %v70
    %266 = vmatprep.subr.mxu0 0.0
    %267 = vmatpush1.msra.mxu0 %v71
    %268 = vmatprep.subr.mxu0 0.0
    %269 = vmatpush1.msra.mxu0 %v72
    %270 = vmatprep.subr.mxu0 0.0
    %271 = vmatpush1.msra.mxu0 %v73
    %272 = vmatprep.subr.mxu0 0.0
    %273 = vmatpush1.msra.mxu0 %v74
    %274 = vmatprep.subr.mxu0 0.0
    %275 = vmatpush1.msra.mxu0 %v75
    %276 = vmatprep.subr.mxu0 0.0
    %277 = vmatpush1.msra.mxu0 %v76
    %278 = vmatprep.subr.mxu0 0.0
    %279 = vmatpush1.msra.mxu0 0.0
    %280 = vmatprep.subr.mxu0 0.0
    %281 = vmatpush1.msra.mxu0 0.0
    %282 = vmatprep.subr.mxu0 0.0
    %283 = vmatpush1.msra.mxu0 0.0
    %284 = vmatprep.subr.mxu0 0.0
    %285 = vmatpush1.msra.mxu0 0.0
    %286 = vmatprep.subr.mxu0 0.0
    %287 = vmatpush1.msra.mxu0 0.0
    %288 = vmatprep.subr.mxu0 0.0
    %289 = vmatpush1.msra.mxu0 0.0
    %290 = vmatprep.subr.mxu0 0.0
    %291 = vmatpush1.msra.mxu0 0.0
    %292 = vmatprep.subr.mxu0 0.0
    %293 = vmatpush1.msra.mxu0 0.0
    %294 = vmatprep.subr.mxu0 0.0
    %295 = vmatpush1.msra.mxu0 0.0
    %296 = vmatprep.subr.mxu0 0.0
    %297 = vmatpush1.msra.mxu0 0.0
    %298 = vmatprep.subr.mxu0 0.0
    %299 = vmatpush1.msra.mxu0 0.0
    %300 = vmatprep.subr.mxu0 0.0
    %301 = vmatpush1.msra.mxu0 0.0
    %302 = vmatprep.subr.mxu0 0.0
    %303 = vmatpush1.msra.mxu0 0.0
    %304 = vmatprep.subr.mxu0 0.0
    %305 = vmatpush1.msra.mxu0 0.0
    %306 = vmatprep.subr.mxu0 0.0
    %307 = vmatpush1.msra.mxu0 0.0
    %308 = vmatprep.subr.mxu0 0.0
    %309 = vmatpush1.msra.mxu0 0.0
    %310 = vmatprep.mubr.f32.mxu0 0.0
    %311 = vmatmul.mubr.f32.gmra.mrb[0].mxu0 %v237
    %v312 = vpop.f32.mrb[0].mxu0
    %v313 = vadd.f32 %v244, %v312
    %v314 = vpop.f32.mrb[0].mxu0
    %315 = vdwg.mxu0
    %v316 = vlaneseq
    %v317 = vand.u32 %v316, 127
    %vm318 = vcmp.lt.s32.totalorder %v317, 16
    %v319 = vsel %vm318, %v313, -1e+30
    %320 = vmax.xlane.f32.xlu0 %v319
    %v321 = vpop.xlane.xlu0 %320
    %v322 = vsub.f32 %v319, %v321
    %v323 = vmul.f32 %v322, 1.442695
    %v324 = vpow.pop %v323
    %v325 = vsel %vm318, %v324, 0.0
    %326 = vadd.xlane.f32.xlu0 %v325
    %v327 = vpop.xlane.xlu0 %326
    %v328 = vrcp.pop %v327
    %v329 = vmul.f32 %v325, %v328
    %v330 = vsel %vm318, %v329, %v313
    %331 = vst [vmem:[%s3] sm:$0xff] %v330
    // Predicated region
    $region22: #{multihead_forward.1} parent=1 // pred_check
      _
    $region23: #{multihead_forward.1} parent=1 // pred_check_branch
      %333 = sbr.rel (0) target = $region25
    $region24: #{multihead_forward.1} parent=1 // pred_region
      _
    $region25: #{multihead_forward.1} parent=1 // pred_fallthru
      _
    // Predicated region
    $region26: #{multihead_forward.1} parent=1 // pred_check
      _
    $region27: #{multihead_forward.1} parent=1 // pred_check_branch
      %335 = sbr.rel (0) target = $region29
    $region28: #{multihead_forward.1} parent=1 // pred_region
      _
    $region29: #{multihead_forward.1} parent=1 // pred_fallthru
      _
    %336 = vsyncpa [#allocation3], 1
    %337 = vsyncpa [#allocation5], 1

</llo_original>
